<compile_context>
chip_gen: v5e
topology: v5e:2x2
jax: 0.10.0
libtpu: 0.0.40
codegen_flags: <defaults>
</compile_context>

<pallas_src>
import jax
import jax.numpy as jnp
import numpy as np
from jax.experimental import pallas as pl
from jax.experimental.pallas import tpu as pltpu


def _add_bcast_3d_kernel(x_ref, p_ref, o_ref):
    # x_ref: (block_b, block_s, H); p_ref: (block_s, H) broadcasts over batch.
    o_ref[...] = x_ref[...] + p_ref[...]


def _add_bcast_2d_kernel(x_ref, p_ref, o_ref):
    # x_ref: (block_b, block_n); p_ref: (1, block_n) broadcasts over batch rows.
    o_ref[...] = x_ref[...] + p_ref[...]


def make_positional_encoding_table(num_hiddens, max_len=1000, dtype=jnp.float32):
    """(max_len, num_hiddens) sin/cos table, built ONCE in the model dtype.

    Matches the d2l module exactly (which assumes even num_hiddens)."""
    position = jnp.arange(max_len, dtype=jnp.float32)[:, None]              # (L, 1)
    inv_freq = jnp.power(
        jnp.float32(10000.0),
        jnp.arange(0, num_hiddens, 2, dtype=jnp.float32) / num_hiddens)     # (H/2,)
    angles = position / inv_freq                                            # (L, H/2)
    P = jnp.zeros((max_len, num_hiddens), dtype=jnp.float32)
    P = P.at[:, 0::2].set(jnp.sin(angles))
    P = P.at[:, 1::2].set(jnp.cos(angles))
    return P.astype(dtype)


def _tpu_params():
    """Best-effort (num_tensorcores, vmem_capacity_bytes) with safe fallbacks."""
    cores, vmem_cap = 1, 64 << 20          # conservative (v7x-sized) defaults
    try:
        info = pltpu.get_tpu_info()
        cap = getattr(info, "vmem_capacity_bytes", None)
        if cap:
            vmem_cap = int(cap)
        for name in ("num_tensorcores", "tensorcore_count", "num_cores",
                     "cores_per_chip"):
            v = getattr(info, name, None)
            if v:
                cores = int(v)
                break
    except Exception:
        pass
    return cores, vmem_cap


def positional_encoding_forward(x, P_table):
    """x: (B, S, H); P_table: (max_len, H) in x.dtype. Returns x + P[:S] (eval)."""
    B, S, H = x.shape
    max_len, H_tbl = P_table.shape
    assert H == H_tbl, "hidden dim mismatch"
    assert S <= max_len, "sequence longer than max_len"
    if P_table.dtype != x.dtype:               # normally a no-op: table prebuilt
        P_table = P_table.astype(x.dtype)

    itemsize = jnp.dtype(x.dtype).itemsize
    cores, vmem_cap = _tpu_params()
    # Double-buffered working-set budget; capped so it fits v7x's 64 MiB VMEM
    # while still allowing large tiles on v5e/v6e (128 MiB).
    budget = min(vmem_cap // 2, 40 << 20)

    # ---- layout choice: lane-dense 2-D path when H is not a lane multiple ----
    use_flat = (H % 128) != 0

    if use_flat:
        # Flatten (S, H) into one lane-dense row so every store is a full-lane
        # unmasked vst even for tiny H (H=32 would otherwise use 1/4 of lanes).
        N = S * H
        x_in = x.reshape(B, N)
        p_in = P_table[:S].reshape(1, N)

        def fits(bb, bn):
            # x + out tiles double-buffered, plus the (double-buffered) P tile.
            return itemsize * (4 * bb * bn + 2 * bn) <= budget

        block_n = N
        block_b = B
        # Shrink the lane tile first (multiples of 128), then the batch tile
        # (multiples of 8) -- keeps every block legal wrt the (8,128) layout.
        while not fits(block_b, block_n) and block_n > 128:
            block_n = max(128, ((block_n // 2) // 128) * 128)
        while not fits(block_b, block_n) and block_b > 8:
            block_b = max(8, ((block_b // 2) // 8) * 8)

        # Megacore (v7x): guarantee >= 2 grid steps so both TensorCores work.
        if cores >= 2 and pl.cdiv(N, block_n) * pl.cdiv(B, block_b) < 2:
            if block_n >= 256:
                block_n = max(128, ((block_n // 2) // 128) * 128)
            elif B >= 16 and block_b % 16 == 0:
                block_b //= 2

        grid = (pl.cdiv(N, block_n), pl.cdiv(B, block_b))  # lane outer, batch inner
        in_specs = [
            pl.BlockSpec((block_b, block_n), lambda j, i: (i, j)),
            pl.BlockSpec((1, block_n), lambda j, i: (0, j)),   # const over inner axis
        ]
        out_specs = pl.BlockSpec((block_b, block_n), lambda j, i: (i, j))
        out_shape = jax.ShapeDtypeStruct((B, N), x.dtype)
        kernel = _add_bcast_2d_kernel
        footprint = itemsize * (4 * block_b * block_n + 2 * block_n)
        args = (x_in, p_in)
    else:
        def fits(bb, bs):
            return itemsize * (4 * bb * bs * H + 2 * bs * H) <= budget

        # Big seq tiles (512-1024 rows) reach ~85% of HBM roofline; shrink only
        # when even a single-batch tile does not fit the VMEM budget (huge H).
        block_s = S if S <= 1024 else 1024
        while not fits(1, block_s) and block_s > 8:
            block_s = max(8, ((block_s // 2) // 8) * 8)

        per_row = 4 * block_s * H * itemsize
        rem = budget - 2 * block_s * H * itemsize
        block_b = int(max(1, min(B, rem // per_row)))

        # Megacore (v7x): guarantee >= 2 grid steps along some parallel axis.
        if cores >= 2 and pl.cdiv(S, block_s) * pl.cdiv(B, block_b) < 2:
            if B >= 2:
                block_b = max(1, (B + 1) // 2)
            elif block_s >= 16:
                block_s = max(8, ((block_s // 2) // 8) * 8)

        grid = (pl.cdiv(S, block_s), pl.cdiv(B, block_b))   # seq outer, batch inner
        in_specs = [
            pl.BlockSpec((block_b, block_s, H), lambda j, i: (i, j, 0)),
            pl.BlockSpec((block_s, H), lambda j, i: (j, 0)),  # const over inner axis
        ]
        out_specs = pl.BlockSpec((block_b, block_s, H), lambda j, i: (i, j, 0))
        out_shape = jax.ShapeDtypeStruct((B, S, H), x.dtype)
        kernel = _add_bcast_3d_kernel
        footprint = itemsize * (4 * block_b * block_s * H + 2 * block_s * H)
        # Pass the full table: the grid only touches the first ceil(S/block_s)
        # blocks, so no per-call slice/convert pass over HBM is needed.
        args = (x, P_table)

    vmem_limit = int(min(vmem_cap, max(footprint + (4 << 20), 32 << 20)))

    cost = pl.CostEstimate(
        flops=B * S * H,                                   # one add per element
        transcendentals=0,                                 # sin/cos precomputed
        bytes_accessed=itemsize * (2 * B * S * H + S * H),
    )

    grid_spec = pltpu.PrefetchScalarGridSpec(
        num_scalar_prefetch=0,
        grid=grid,
        in_specs=in_specs,
        out_specs=out_specs,
    )

    out = pl.pallas_call(
        kernel,
        out_shape=out_shape,
        grid_spec=grid_spec,
        compiler_params=pltpu.CompilerParams(
            dimension_semantics=("parallel", "parallel"),
            vmem_limit_bytes=vmem_limit,
        ),
        cost_estimate=cost,
    )(*args)

    return out.reshape(B, S, H) if use_flat else out


if __name__ == "__main__":
    key = jax.random.PRNGKey(0)

    B, S, H = 2, 8, 32                      # batch=2, seq=8, num_hiddens=32
    x = jax.random.normal(key, (B, S, H), dtype=jnp.float32)

    P_table = make_positional_encoding_table(H, max_len=1000, dtype=x.dtype)

    out = positional_encoding_forward(x, P_table)
    out = jax.block_until_ready(out)

    ref = x + P_table[None, :S, :]
    np.testing.assert_allclose(np.asarray(out), np.asarray(ref),
                               atol=1e-6, rtol=1e-6)

    print("KERNEL_OK")
</pallas_src>

<mosaic_0001>
module attributes {stable_mosaic.version = 11 : i64} {
  func.func @_add_bcast_2d_kernel(%arg0: i32, %arg1: i32, %arg2: memref<2x256xf32, #tpu.memory_space<vmem>>, %arg3: memref<1x256xf32, #tpu.memory_space<vmem>>, %arg4: memref<2x256xf32, #tpu.memory_space<vmem>>) attributes {dimension_semantics = [#tpu.dimension_semantics<parallel>, #tpu.dimension_semantics<parallel>], iteration_bounds = array<i64: 1, 1>, scalar_prefetch = 0 : i64, scratch_operands = 0 : i64, tpu.core_type = #tpu.core_type<tc>, window_params = [{transform_indices = @transform_0, window_bounds = array<i64: 2, 256>}, {transform_indices = @transform_1, window_bounds = array<i64: 1, 256>}, {transform_indices = @transform_2, window_bounds = array<i64: 2, 256>}]} {
    %c0 = arith.constant 0 : index
    %c0_0 = arith.constant 0 : index
    %0 = vector.load %arg2[%c0, %c0_0] : memref<2x256xf32, #tpu.memory_space<vmem>>, vector<2x256xf32>
    %c0_1 = arith.constant 0 : index
    %c0_2 = arith.constant 0 : index
    %1 = vector.load %arg3[%c0_1, %c0_2] : memref<1x256xf32, #tpu.memory_space<vmem>>, vector<1x256xf32>
    %2 = vector.broadcast %1 : vector<1x256xf32> to vector<2x256xf32>
    %3 = arith.addf %0, %2 : vector<2x256xf32>
    %c0_3 = arith.constant 0 : index
    %c0_4 = arith.constant 0 : index
    %4 = vector.load %arg4[%c0_3, %c0_4] : memref<2x256xf32, #tpu.memory_space<vmem>>, vector<2x256xf32>
    tpu.vector_store %arg4[%c0_3, %c0_4], %3 {strides = array<i32>} : memref<2x256xf32, #tpu.memory_space<vmem>>, vector<2x256xf32>,
    return
  }
  func.func @transform_0(%arg0: i32, %arg1: i32) -> (i32, i32) {
    %c0_i32 = arith.constant 0 : i32
    return %arg1, %arg0 : i32, i32
  }
  func.func @transform_1(%arg0: i32, %arg1: i32) -> (i32, i32) {
    %c0_i32 = arith.constant 0 : i32
    %c0_i32_0 = arith.constant 0 : i32
    return %c0_i32, %arg0 : i32, i32
  }
  func.func @transform_2(%arg0: i32, %arg1: i32) -> (i32, i32) {
    %c0_i32 = arith.constant 0 : i32
    return %arg1, %arg0 : i32, i32
  }
}

</mosaic_0001>

<llo_original>
// kernel: tpu_custom_call.1
$region0: #{tpu_custom_call.1}
  #allocation0 [shape = 'u32[]', space=smem, size = 0x4, offset = 0x4, fixed_abs, tag = 'smem constant byte address 0x4 - core index']
  #allocation1 [shape = 'u32[72,128]{1,0:T(1,128)}', space=vmem, size = 0x9000, scoped, tag = 'internal scratch']
  %s0 = inlined_call_operand.hbm [shape: f32[2,256], index: 0, kind: input, shape index: {}]
  %s1 = inlined_call_operand.hbm [shape: f32[1,256], index: 1, kind: input, shape index: {}]
  %s2 = inlined_call_operand.hbm [shape: f32[2,256], index: 2, kind: output, shape index: {}]
  %s3 = sld [smem:[#allocation0]]
  $region26: #{tpu_custom_call.1} parent=0
    _
  %s5 = ssub.s32 1, %s3
  %s6 = scalar_select 0, %s5, %s3
  $region1: #{tpu_custom_call.1} parent=0
    #allocation2 [shape = 'u8[2048]{0}', space=vmem, size = 0x800, scoped, tag = 'input window, operand 0, single buffered']
    #allocation3 [shape = 's32[1]{0}', space=sflag, size = 0x4, scoped, tag = 'scoped memory for tpu_custom_call.1']
    #allocation4 [shape = 's32[1]{0}', space=sflag, size = 0x4, scoped, tag = 'scoped memory for tpu_custom_call.1']
    #allocation5 [shape = 'u8[1024]{0}', space=vmem, size = 0x400, scoped, tag = 'input window, operand 1, single buffered']
    #allocation6 [shape = 's32[1]{0}', space=sflag, size = 0x4, scoped, tag = 'scoped memory for tpu_custom_call.1']
    #allocation7 [shape = 'u8[2048]{0}', space=vmem, size = 0x800, scoped, tag = 'output window, operand 0, single buffered']
    %7 = vsyncpa [#allocation3], 0
    %8 = vsyncpa [#allocation6], 0
    %9 = vsyncpa [#allocation4], 0
    // Predicated region
    $region2: #{tpu_custom_call.1} parent=1 // pred_check
      _
    $region3: #{tpu_custom_call.1} parent=1 // pred_check_branch
      %11 = sbr.rel (0) target = $region5
    $region4: #{tpu_custom_call.1} parent=1 // pred_region
      %13 = vsyncadd [#allocation3], 0
      %s15 = sshll.u32 %s0, 4
      %s16 = int_to_ptr.hbm [resolvable:$true] %s15
      %s17 = sshll.u32 [#allocation2], 4
      %s18 = int_to_ptr.vmem [resolvable:$true] %s17
      %20 = dma.hbm_to_vmem [thread:$0]  %s16, 64, %s18, [#allocation3]
    $region5: #{tpu_custom_call.1} parent=1 // pred_fallthru
      _
    // Predicated region
    $region6: #{tpu_custom_call.1} parent=1 // pred_check
      _
    $region7: #{tpu_custom_call.1} parent=1 // pred_check_branch
      %22 = sbr.rel (0) target = $region9
    $region8: #{tpu_custom_call.1} parent=1 // pred_region
      %24 = vsyncadd [#allocation6], 0
      %s26 = sshll.u32 %s1, 4
      %s27 = int_to_ptr.hbm [resolvable:$true] %s26
      %s28 = sshll.u32 [#allocation5], 4
      %s29 = int_to_ptr.vmem [resolvable:$true] %s28
      %31 = dma.hbm_to_vmem [thread:$0]  %s27, 32, %s29, [#allocation6]
    $region9: #{tpu_custom_call.1} parent=1 // pred_fallthru
      _
    // Predicated region
    $region10: #{tpu_custom_call.1} parent=1 // pred_check
      _
    $region11: #{tpu_custom_call.1} parent=1 // pred_check_branch
      %33 = sbr.rel (0) target = $region13
    $region12: #{tpu_custom_call.1} parent=1 // pred_region
      %35 = dma.done [#allocation3], 64
    $region13: #{tpu_custom_call.1} parent=1 // pred_fallthru
      _
    // Predicated region
    $region14: #{tpu_custom_call.1} parent=1 // pred_check
      _
    $region15: #{tpu_custom_call.1} parent=1 // pred_check_branch
      %37 = sbr.rel (0) target = $region17
    $region16: #{tpu_custom_call.1} parent=1 // pred_region
      %39 = dma.done [#allocation6], 32
    $region17: #{tpu_custom_call.1} parent=1 // pred_fallthru
      _
    %v40 = vld [vmem:[#allocation2] sm:$0xf]
    %v41 = vld [vmem:[#allocation5] sm:$0x3]
    %v43 = vperm.slane %v41, 0
    %v44 = vperm.slane %v41, 1
    %v45 = vrot.slane %v44, 6
    %vm46 = vcmask 1041408
    %v47 = vsel %vm46, %v43, %v45
    %v49 = vadd.f32 %v40, %v47
    %50 = vst [vmem:[#allocation7] sm:$0xf] %v49
    // Predicated region
    $region18: #{tpu_custom_call.1} parent=1 // pred_check
      _
    $region19: #{tpu_custom_call.1} parent=1 // pred_check_branch
      %52 = sbr.rel (0) target = $region21
    $region20: #{tpu_custom_call.1} parent=1 // pred_region
      %54 = vsyncadd [#allocation4], 0
      %s56 = sshll.u32 [#allocation7], 4
      %s57 = int_to_ptr.vmem [resolvable:$true] %s56
      %s58 = sshll.u32 %s2, 4
      %s59 = int_to_ptr.hbm [resolvable:$true] %s58
      %61 = dma.vmem_to_hbm [thread:$0]  %s57, 64, %s59, [#allocation4]
    $region21: #{tpu_custom_call.1} parent=1 // pred_fallthru
      _
    // Predicated region
    $region22: #{tpu_custom_call.1} parent=1 // pred_check
      _
    $region23: #{tpu_custom_call.1} parent=1 // pred_check_branch
      %63 = sbr.rel (0) target = $region25
    $region24: #{tpu_custom_call.1} parent=1 // pred_region
      %65 = dma.done [#allocation4], 64
    $region25: #{tpu_custom_call.1} parent=1 // pred_fallthru
      _
    %66 = vsyncpa [#allocation3], 1
    %67 = vsyncpa [#allocation6], 1
    %68 = vsyncpa [#allocation4], 1

</llo_original>
